<compile_context>
chip_gen: v7x
topology: tpu7x:2x2x1
jax: 0.10.0
libtpu: 0.0.40
codegen_flags: <defaults>
</compile_context>

<pallas_src>
import functools

import jax
import jax.numpy as jnp
from jax.experimental import pallas as pl
from jax.experimental.pallas import tpu as pltpu

EPS = 1e-5  # RevIN default eps


def _fbp_l_kernel(x_ref, wt_ref, b_ref, gamma_ref, beta_ref, invgd_ref, o_ref,
                  *, batch_tile, seq_len):
    # x_ref:     (TB, L, Ct)  input block, native dtype (channels on lanes)
    # wt_ref:    (T, L)       bf16 head weight (transposed), resident
    # b_ref:     (T, 1)       f32 head bias, resident
    # gamma_ref: (1, Ct)      f32 RevIN affine weight (per channel, lane-dense)
    # beta_ref:  (1, Ct)      f32 RevIN affine bias
    # invgd_ref: (1, Ct)      f32 precomputed 1 / (gamma + eps^2)
    # o_ref:     (TB, T, Ct)  output block
    wt = wt_ref[...]
    bias = b_ref[...]                                  # (T, 1), broadcasts on lanes
    gamma = gamma_ref[...]
    beta = beta_ref[...]
    inv_gd = invgd_ref[...]
    inv_l = 1.0 / seq_len

    for b in range(batch_tile):                        # static unroll, TB is small
        x = x_ref[b].astype(jnp.float32)               # (L, Ct)

        # RevIN stats over time: two independent reductions, biased variance.
        mean = jnp.sum(x, axis=0, keepdims=True) * inv_l          # (1, Ct)
        ex2 = jnp.sum(x * x, axis=0, keepdims=True) * inv_l       # (1, Ct)
        var = jnp.maximum(ex2 - mean * mean, 0.0)                 # guard cancellation
        inv_std = jax.lax.rsqrt(var + EPS)                        # EUP rsqrt
        stdev = (var + EPS) * inv_std                             # == sqrt(var + eps)

        # Normalize + affine, bf16 cast for the MXU (f32 accumulation).
        xn = (x - mean) * (inv_std * gamma) + beta                # (L, Ct) f32
        y = jnp.dot(wt, xn.astype(jnp.bfloat16),
                    preferred_element_type=jnp.float32)           # (T, Ct) f32
        y = y + bias

        # RevIN 'denorm' with the host-precomputed reciprocal.
        o_ref[b] = ((y - beta) * (inv_gd * stdev) + mean).astype(o_ref.dtype)


def _pick_channel_tile(C):
    # Channels live on the lane axis.  Use the full channel extent unless C is
    # large and 128-aligned, in which case tile lane-densely.
    if C > 512 and C % 128 == 0:
        ct = 512
        while C % ct:
            ct -= 128
        return ct
    return C


def _pick_batch_tile(B, per_batch_bytes, c_tiles,
                     budget_bytes=9 * 1024 * 1024, cap=8):
    tb = min(B, cap, max(1, budget_bytes // max(per_batch_bytes, 1)))
    if c_tiles < 2 and B >= 2:
        tb = min(tb, B // 2)          # keep >= 2 grid steps (v7x megacore)
    tb = max(tb, 1)
    while tb > 1 and B % tb != 0:     # avoid ragged edge blocks
        tb -= 1
    return tb


def fbp_l_forward(x_blc, w_lt, b_t, gamma_c, beta_c):
    """x_blc: [B, L, C] -> returns [B, T, C] (matches PyTorch Model.forward)."""
    B, L, C = x_blc.shape
    T = w_lt.shape[1]
    in_bytes = x_blc.dtype.itemsize
    out_dtype = x_blc.dtype

    Ct = _pick_channel_tile(C)
    c_tiles = pl.cdiv(C, Ct)
    per_batch_bytes = 2 * L * Ct * in_bytes + 2 * T * Ct * out_dtype.itemsize
    TB = _pick_batch_tile(B, per_batch_bytes, c_tiles)
    grid = (B // TB, c_tiles)

    # Host-side (size-C / size-T) parameter prep — tiny, not an HBM pass over x.
    wt = jnp.transpose(w_lt).astype(jnp.bfloat16)              # (T, L)
    b_col = b_t.astype(jnp.float32).reshape(T, 1)              # (T, 1)
    gamma = gamma_c.astype(jnp.float32).reshape(1, C)
    beta = beta_c.astype(jnp.float32).reshape(1, C)
    inv_gd = 1.0 / (gamma + EPS * EPS)                         # precomputed denorm recip

    kernel = functools.partial(_fbp_l_kernel, batch_tile=TB, seq_len=float(L))

    cost = pl.CostEstimate(
        flops=2 * B * T * L * C,
        transcendentals=B * C,                                 # rsqrt per (b, c)
        bytes_accessed=(x_blc.size * in_bytes + B * T * C * out_dtype.itemsize
                        + wt.size * 2 + (T + 3 * C) * 4),
    )

    out = pl.pallas_call(
        kernel,
        out_shape=jax.ShapeDtypeStruct((B, T, C), out_dtype),
        grid_spec=pltpu.PrefetchScalarGridSpec(
            num_scalar_prefetch=0,
            grid=grid,
            in_specs=[
                pl.BlockSpec((TB, L, Ct), lambda i, j: (i, 0, j)),   # x block
                pl.BlockSpec((T, L), lambda i, j: (0, 0)),           # W^T, resident
                pl.BlockSpec((T, 1), lambda i, j: (0, 0)),           # bias, resident
                pl.BlockSpec((1, Ct), lambda i, j: (0, j)),          # gamma
                pl.BlockSpec((1, Ct), lambda i, j: (0, j)),          # beta
                pl.BlockSpec((1, Ct), lambda i, j: (0, j)),          # 1/(gamma+eps^2)
            ],
            out_specs=pl.BlockSpec((TB, T, Ct), lambda i, j: (i, 0, j)),
        ),
        compiler_params=pltpu.CompilerParams(
            dimension_semantics=("parallel", "parallel"),
            vmem_limit_bytes=32 * 1024 * 1024,
        ),
        cost_estimate=cost,
    )(x_blc, wt, b_col, gamma, beta, inv_gd)

    return out                                                  # [B, T, C]


def _reference(x_blc, w_lt, b_t, gamma_c, beta_c):
    """Pure-JAX (f32) reference of the same forward, for correctness checking."""
    x = jnp.transpose(x_blc, (0, 2, 1))                         # [B, C, L]
    mean = jnp.mean(x, axis=-1, keepdims=True)
    var = jnp.mean((x - mean) ** 2, axis=-1, keepdims=True)
    stdev = jnp.sqrt(var + EPS)
    xn = (x - mean) / stdev
    xn = xn * gamma_c[None, :, None] + beta_c[None, :, None]
    y = jnp.einsum("bcl,lt->bct", xn, w_lt) + b_t[None, None, :]
    y = (y - beta_c[None, :, None]) / (gamma_c[None, :, None] + EPS * EPS)
    y = y * stdev + mean
    return jnp.transpose(y, (0, 2, 1))                          # [B, T, C]


if __name__ == "__main__":
    # Small config: batch=2, enc_in (channels)=4, seq_len=16, pred_len=8
    B, C, L, T = 2, 4, 16, 8

    key = jax.random.PRNGKey(0)
    kx, kw, kb, kg, kbt = jax.random.split(key, 5)

    x = jax.random.normal(kx, (B, L, C), dtype=jnp.float32)

    # nn.Linear(L, T): weight [T, L] ~ U(-1/sqrt(L), 1/sqrt(L)); stored transposed [L, T]
    bound = 1.0 / (L ** 0.5)
    w_lt = jax.random.uniform(kw, (L, T), minval=-bound, maxval=bound,
                              dtype=jnp.float32)
    b_t = jax.random.uniform(kb, (T,), minval=-bound, maxval=bound,
                             dtype=jnp.float32)

    # RevIN affine params (torch init is ones/zeros; perturb to exercise the path)
    gamma_c = 1.0 + 0.1 * jax.random.normal(kg, (C,), dtype=jnp.float32)
    beta_c = 0.1 * jax.random.normal(kbt, (C,), dtype=jnp.float32)

    out = fbp_l_forward(x, w_lt, b_t, gamma_c, beta_c)
    out = jax.block_until_ready(out)

    ref = _reference(x, w_lt, b_t, gamma_c, beta_c)
    assert out.shape == (B, T, C), out.shape
    # bf16 matmul (f32 accumulation) -> relaxed tolerance vs. the f32 reference.
    assert jnp.allclose(out, ref, atol=2e-2, rtol=2e-2), (
        "mismatch vs reference, max abs diff = "
        f"{float(jnp.max(jnp.abs(out - ref)))}")

    print("KERNEL_OK")
</pallas_src>

<mosaic_0001>
module attributes {stable_mosaic.version = 11 : i64} {
  func.func @_fbp_l_kernel(%arg0: i32, %arg1: i32, %arg2: memref<1x16x4xf32, #tpu.memory_space<vmem>>, %arg3: memref<8x16xbf16, #tpu.memory_space<vmem>>, %arg4: memref<8x1xf32, #tpu.memory_space<vmem>>, %arg5: memref<1x4xf32, #tpu.memory_space<vmem>>, %arg6: memref<1x4xf32, #tpu.memory_space<vmem>>, %arg7: memref<1x4xf32, #tpu.memory_space<vmem>>, %arg8: memref<1x8x4xf32, #tpu.memory_space<vmem>>) attributes {dimension_semantics = [#tpu.dimension_semantics<parallel>, #tpu.dimension_semantics<parallel>], iteration_bounds = array<i64: 2, 1>, scalar_prefetch = 0 : i64, scratch_operands = 0 : i64, tpu.core_type = #tpu.core_type<tc>, window_params = [{transform_indices = @transform_0, window_bounds = array<i64: 1, 16, 4>}, {pipeline_mode = #tpu.pipeline_mode<synchronous>, transform_indices = @transform_1, window_bounds = array<i64: 8, 16>}, {pipeline_mode = #tpu.pipeline_mode<synchronous>, transform_indices = @transform_2, window_bounds = array<i64: 8, 1>}, {transform_indices = @transform_3, window_bounds = array<i64: 1, 4>}, {transform_indices = @transform_4, window_bounds = array<i64: 1, 4>}, {transform_indices = @transform_5, window_bounds = array<i64: 1, 4>}, {transform_indices = @transform_6, window_bounds = array<i64: 1, 8, 4>}]} {
    %c0 = arith.constant 0 : index
    %c0_0 = arith.constant 0 : index
    %0 = vector.load %arg3[%c0, %c0_0] : memref<8x16xbf16, #tpu.memory_space<vmem>>, vector<8x16xbf16>
    %c0_1 = arith.constant 0 : index
    %c0_2 = arith.constant 0 : index
    %1 = vector.load %arg4[%c0_1, %c0_2] : memref<8x1xf32, #tpu.memory_space<vmem>>, vector<8x1xf32>
    %c0_3 = arith.constant 0 : index
    %c0_4 = arith.constant 0 : index
    %2 = vector.load %arg5[%c0_3, %c0_4] : memref<1x4xf32, #tpu.memory_space<vmem>>, vector<1x4xf32>
    %c0_5 = arith.constant 0 : index
    %c0_6 = arith.constant 0 : index
    %3 = vector.load %arg6[%c0_5, %c0_6] : memref<1x4xf32, #tpu.memory_space<vmem>>, vector<1x4xf32>
    %c0_7 = arith.constant 0 : index
    %c0_8 = arith.constant 0 : index
    %4 = vector.load %arg7[%c0_7, %c0_8] : memref<1x4xf32, #tpu.memory_space<vmem>>, vector<1x4xf32>
    %c0_9 = arith.constant 0 : index
    %c0_10 = arith.constant 0 : index
    %c0_11 = arith.constant 0 : index
    %5 = vector.load %arg2[%c0_9, %c0_10, %c0_11] : memref<1x16x4xf32, #tpu.memory_space<vmem>>, vector<1x16x4xf32>
    %6 = vector.shape_cast %5 : vector<1x16x4xf32> to vector<16x4xf32>
    %cst = arith.constant dense<0.000000e+00> : vector<4xf32>
    %7 = vector.multi_reduction <add>, %6, %cst [0] : vector<16x4xf32> to vector<4xf32>
    %8 = vector.shape_cast %7 : vector<4xf32> to vector<1x4xf32>
    %cst_12 = arith.constant 6.250000e-02 : f32
    %9 = vector.broadcast %cst_12 : f32 to vector<1x4xf32>
    %10 = arith.mulf %8, %9 : vector<1x4xf32>
    %11 = arith.mulf %6, %6 : vector<16x4xf32>
    %cst_13 = arith.constant dense<0.000000e+00> : vector<4xf32>
    %12 = vector.multi_reduction <add>, %11, %cst_13 [0] : vector<16x4xf32> to vector<4xf32>
    %13 = vector.shape_cast %12 : vector<4xf32> to vector<1x4xf32>
    %cst_14 = arith.constant 6.250000e-02 : f32
    %14 = vector.broadcast %cst_14 : f32 to vector<1x4xf32>
    %15 = arith.mulf %13, %14 : vector<1x4xf32>
    %16 = arith.mulf %10, %10 : vector<1x4xf32>
    %17 = arith.subf %15, %16 : vector<1x4xf32>
    %cst_15 = arith.constant 0.000000e+00 : f32
    %18 = vector.broadcast %cst_15 : f32 to vector<1x4xf32>
    %19 = arith.maximumf %17, %18 : vector<1x4xf32>
    %cst_16 = arith.constant 9.99999974E-6 : f32
    %20 = vector.broadcast %cst_16 : f32 to vector<1x4xf32>
    %21 = arith.addf %19, %20 : vector<1x4xf32>
    %22 = math.rsqrt %21 : vector<1x4xf32>
    %cst_17 = arith.constant 9.99999974E-6 : f32
    %23 = vector.broadcast %cst_17 : f32 to vector<1x4xf32>
    %24 = arith.addf %19, %23 : vector<1x4xf32>
    %25 = arith.mulf %24, %22 : vector<1x4xf32>
    %26 = vector.broadcast %10 : vector<1x4xf32> to vector<16x4xf32>
    %27 = arith.subf %6, %26 : vector<16x4xf32>
    %28 = arith.mulf %22, %2 : vector<1x4xf32>
    %29 = vector.broadcast %28 : vector<1x4xf32> to vector<16x4xf32>
    %30 = arith.mulf %27, %29 : vector<16x4xf32>
    %31 = vector.broadcast %3 : vector<1x4xf32> to vector<16x4xf32>
    %32 = arith.addf %30, %31 : vector<16x4xf32>
    %33 = arith.truncf %32 : vector<16x4xf32> to vector<16x4xbf16>
    %cst_18 = arith.constant dense<0.000000e+00> : vector<8x4xf32>
    %34 = tpu.matmul %0, %33, %cst_18 {dimension_numbers = #tpu.dot_dimension_numbers<[1], [0], [0], [1], [0, 0, 1, 1], [], []>} : vector<8x16xbf16>, vector<16x4xbf16>, vector<8x4xf32> -> vector<8x4xf32>
    %35 = vector.broadcast %1 : vector<8x1xf32> to vector<8x4xf32>
    %36 = arith.addf %34, %35 : vector<8x4xf32>
    %37 = vector.broadcast %3 : vector<1x4xf32> to vector<8x4xf32>
    %38 = arith.subf %36, %37 : vector<8x4xf32>
    %39 = arith.mulf %4, %25 : vector<1x4xf32>
    %40 = vector.broadcast %39 : vector<1x4xf32> to vector<8x4xf32>
    %41 = arith.mulf %38, %40 : vector<8x4xf32>
    %42 = vector.broadcast %10 : vector<1x4xf32> to vector<8x4xf32>
    %43 = arith.addf %41, %42 : vector<8x4xf32>
    %c0_19 = arith.constant 0 : index
    %c0_20 = arith.constant 0 : index
    %c0_21 = arith.constant 0 : index
    %44 = vector.load %arg8[%c0_19, %c0_20, %c0_21] : memref<1x8x4xf32, #tpu.memory_space<vmem>>, vector<1x8x4xf32>
    %45 = vector.shape_cast %44 : vector<1x8x4xf32> to vector<8x4xf32>
    %46 = vector.shape_cast %43 : vector<8x4xf32> to vector<1x8x4xf32>
    tpu.vector_store %arg8[%c0_19, %c0_20, %c0_21], %46 {strides = array<i32>} : memref<1x8x4xf32, #tpu.memory_space<vmem>>, vector<1x8x4xf32>,
    return
  }
  func.func @transform_0(%arg0: i32, %arg1: i32) -> (i32, i32, i32) {
    %c0_i32 = arith.constant 0 : i32
    %c0_i32_0 = arith.constant 0 : i32
    return %arg0, %c0_i32, %arg1 : i32, i32, i32
  }
  func.func @transform_1(%arg0: i32, %arg1: i32) -> (i32, i32) {
    %c0_i32 = arith.constant 0 : i32
    %c0_i32_0 = arith.constant 0 : i32
    %c0_i32_1 = arith.constant 0 : i32
    return %c0_i32, %c0_i32_0 : i32, i32
  }
  func.func @transform_2(%arg0: i32, %arg1: i32) -> (i32, i32) {
    %c0_i32 = arith.constant 0 : i32
    %c0_i32_0 = arith.constant 0 : i32
    %c0_i32_1 = arith.constant 0 : i32
    return %c0_i32, %c0_i32_0 : i32, i32
  }
  func.func @transform_3(%arg0: i32, %arg1: i32) -> (i32, i32) {
    %c0_i32 = arith.constant 0 : i32
    %c0_i32_0 = arith.constant 0 : i32
    return %c0_i32, %arg1 : i32, i32
  }
  func.func @transform_4(%arg0: i32, %arg1: i32) -> (i32, i32) {
    %c0_i32 = arith.constant 0 : i32
    %c0_i32_0 = arith.constant 0 : i32
    return %c0_i32, %arg1 : i32, i32
  }
  func.func @transform_5(%arg0: i32, %arg1: i32) -> (i32, i32) {
    %c0_i32 = arith.constant 0 : i32
    %c0_i32_0 = arith.constant 0 : i32
    return %c0_i32, %arg1 : i32, i32
  }
  func.func @transform_6(%arg0: i32, %arg1: i32) -> (i32, i32, i32) {
    %c0_i32 = arith.constant 0 : i32
    %c0_i32_0 = arith.constant 0 : i32
    return %arg0, %c0_i32, %arg1 : i32, i32, i32
  }
}

</mosaic_0001>

<llo_original>
// kernel: tpu_custom_call.1
$region0: #{tpu_custom_call.1}
  #allocation0 [shape = 'u32[]', space=smem, size = 0x4, offset = 0x4, fixed_abs, tag = 'smem constant byte address 0x4 - core index']
  #allocation1 [shape = 'u32[144,128]{1,0:T(1,128)}', space=vmem, size = 0x12000, scoped, tag = 'internal scratch']
  %s0 = inlined_call_operand.vmem [shape: f32[2,16,4], index: 0, kind: input, shape index: {}]
  %s1 = inlined_call_operand.vmem [shape: bf16[8,16], index: 1, kind: input, shape index: {}]
  %s2 = inlined_call_operand.vmem [shape: f32[8,1], index: 2, kind: input, shape index: {}]
  %s3 = inlined_call_operand.vmem [shape: f32[1,4], index: 3, kind: input, shape index: {}]
  %s4 = inlined_call_operand.vmem [shape: f32[1,4], index: 4, kind: input, shape index: {}]
  %s5 = inlined_call_operand.vmem [shape: f32[1,4], index: 5, kind: input, shape index: {}]
  %s6 = inlined_call_operand.vmem [shape: f32[2,8,4], index: 6, kind: output, shape index: {}]
  %s7 = sld [smem:[#allocation0]]
  $region57: #{tpu_custom_call.1} parent=0
    _
  %s9 = ssub.s32 1, %s7
  %s10 = scalar_select 0, %s9, %s7
  loop: start=0, step=1, limit=4
  $region2: #{tpu_custom_call.1} parent=0 // loop_pre_header
    _
  $region3: #{tpu_custom_call.1} parent=0 // loop_header
    %s12 = sphi 0, %s16
    %p13 = scmp.ge.s32.totalorder %s12, 4
    %s19 = sphi 0, %s31
    %s20 = sphi 0, %s27
    %s21 = sphi 0, %s19
    %s22 = sphi 0, %s20
    %s23 = sphi 0, %s21
    %s24 = sphi 0, %s22
    %s36 = sphi 0, %s38
    %s39 = sphi 0, %s36
    %s40 = sphi 0, %s39
    %s56 = sphi 0, %s40
    %s60 = sphi 0, %s60
    %s62 = sphi 0, %s60
    %s63 = sphi 0, %s62
    %s77 = sphi 0, %s63
    %s81 = sphi 0, %s81
    %s83 = sphi 0, %s81
    %s84 = sphi 0, %s83
    %s98 = sphi 0, %s84
    %s104 = sphi 0, %s106
    %s107 = sphi 0, %s104
    %s108 = sphi 0, %s107
    %s124 = sphi 0, %s108
    %s130 = sphi 0, %s132
    %s133 = sphi 0, %s130
    %s134 = sphi 0, %s133
    %s150 = sphi 0, %s134
    %s156 = sphi 0, %s158
    %s159 = sphi 0, %s156
    %s160 = sphi 0, %s159
    %s176 = sphi 0, %s160
    %s184 = sphi 0, %s186
    %s187 = sphi 0, %s184
    %s188 = sphi 0, %s187
    %s204 = sphi 0, %s188
  $region4: #{tpu_custom_call.1} parent=0 // loop_header_branch
    %15 = sbr.rel (%p13) target = $region8
  $region5: #{tpu_custom_call.1} parent=0 // loop_body
    %s17 = ssub.s32 %s12, 1
    %s18 = ssub.s32 %s12, 2
    %s25 = sadd.s32 1, %s20
    %p26 = scmp.ge.s32.totalorder %s25, 1
    %s27 = scalar_select %p26, 0, %s25
    %s28 = sadd.s32 1, %s19
    %s29 = scalar_select %p26, %s28, %s19
    %p30 = scmp.ge.s32.totalorder %s29, 2
    %s31 = scalar_select %p30, 0, %s29
    %s32 = ssub.s32 %s19, %s31
    %s33 = ssub.s32 %s20, %s27
    %s34 = sor.u32 %s32, %s33
    %p35 = scmp.eq.s32.totalorder %s34, 0
    %s37 = sadd.s32 %s36, 1
    %s38 = scalar_select %p35, %s36, %s37
    %p41 = pneg %p35
    %p42 = scmp.eq.s32.totalorder %s12, 1
    %p43 = por %p41, %p42
    %p44 = scmp.ne.s32.totalorder %s36, %s39
    %p45 = scmp.eq.s32.totalorder %s12, 0
    %p46 = por %p44, %p45
    %p47 = scmp.ne.s32.totalorder %s36, %s39
    %p48 = scmp.eq.s32.totalorder %s17, 1
    %p49 = por %p47, %p48
    %p50 = scmp.ne.s32.totalorder %s39, %s40
    %p51 = scmp.eq.s32.totalorder %s17, 0
    %p52 = por %p50, %p51
    %p53 = scmp.ne.s32.totalorder %s39, %s40
    %p54 = scmp.eq.s32.totalorder %s18, 1
    %p55 = por %p53, %p54
    %p57 = scmp.ne.s32.totalorder %s40, %s56
    %p58 = scmp.eq.s32.totalorder %s18, 0
    %p59 = por %p57, %p58
    %s61 = sadd.s32 %s60, 1
    %p64 = scmp.eq.s32.totalorder %s12, 1
    %p65 = scmp.ne.s32.totalorder %s60, %s62
    %p66 = scmp.eq.s32.totalorder %s12, 0
    %p67 = por %p65, %p66
    %p68 = scmp.ne.s32.totalorder %s60, %s62
    %p69 = scmp.eq.s32.totalorder %s17, 1
    %p70 = por %p68, %p69
    %p71 = scmp.ne.s32.totalorder %s62, %s63
    %p72 = scmp.eq.s32.totalorder %s17, 0
    %p73 = por %p71, %p72
    %p74 = scmp.ne.s32.totalorder %s62, %s63
    %p75 = scmp.eq.s32.totalorder %s18, 1
    %p76 = por %p74, %p75
    %p78 = scmp.ne.s32.totalorder %s63, %s77
    %p79 = scmp.eq.s32.totalorder %s18, 0
    %p80 = por %p78, %p79
    %s82 = sadd.s32 %s81, 1
    %p85 = scmp.eq.s32.totalorder %s12, 1
    %p86 = scmp.ne.s32.totalorder %s81, %s83
    %p87 = scmp.eq.s32.totalorder %s12, 0
    %p88 = por %p86, %p87
    %p89 = scmp.ne.s32.totalorder %s81, %s83
    %p90 = scmp.eq.s32.totalorder %s17, 1
    %p91 = por %p89, %p90
    %p92 = scmp.ne.s32.totalorder %s83, %s84
    %p93 = scmp.eq.s32.totalorder %s17, 0
    %p94 = por %p92, %p93
    %p95 = scmp.ne.s32.totalorder %s83, %s84
    %p96 = scmp.eq.s32.totalorder %s18, 1
    %p97 = por %p95, %p96
    %p99 = scmp.ne.s32.totalorder %s84, %s98
    %p100 = scmp.eq.s32.totalorder %s18, 0
    %p101 = por %p99, %p100
    %s102 = ssub.s32 %s20, %s27
    %p103 = scmp.eq.s32.totalorder %s102, 0
    %s105 = sadd.s32 %s104, 1
    %s106 = scalar_select %p103, %s104, %s105
    %p109 = pneg %p103
    %p110 = scmp.eq.s32.totalorder %s12, 1
    %p111 = por %p109, %p110
    %p112 = scmp.ne.s32.totalorder %s104, %s107
    %p113 = scmp.eq.s32.totalorder %s12, 0
    %p114 = por %p112, %p113
    %p115 = scmp.ne.s32.totalorder %s104, %s107
    %p116 = scmp.eq.s32.totalorder %s17, 1
    %p117 = por %p115, %p116
    %p118 = scmp.ne.s32.totalorder %s107, %s108
    %p119 = scmp.eq.s32.totalorder %s17, 0
    %p120 = por %p118, %p119
    %p121 = scmp.ne.s32.totalorder %s107, %s108
    %p122 = scmp.eq.s32.totalorder %s18, 1
    %p123 = por %p121, %p122
    %p125 = scmp.ne.s32.totalorder %s108, %s124
    %p126 = scmp.eq.s32.totalorder %s18, 0
    %p127 = por %p125, %p126
    %s128 = ssub.s32 %s20, %s27
    %p129 = scmp.eq.s32.totalorder %s128, 0
    %s131 = sadd.s32 %s130, 1
    %s132 = scalar_select %p129, %s130, %s131
    %p135 = pneg %p129
    %p136 = scmp.eq.s32.totalorder %s12, 1
    %p137 = por %p135, %p136
    %p138 = scmp.ne.s32.totalorder %s130, %s133
    %p139 = scmp.eq.s32.totalorder %s12, 0
    %p140 = por %p138, %p139
    %p141 = scmp.ne.s32.totalorder %s130, %s133
    %p142 = scmp.eq.s32.totalorder %s17, 1
    %p143 = por %p141, %p142
    %p144 = scmp.ne.s32.totalorder %s133, %s134
    %p145 = scmp.eq.s32.totalorder %s17, 0
    %p146 = por %p144, %p145
    %p147 = scmp.ne.s32.totalorder %s133, %s134
    %p148 = scmp.eq.s32.totalorder %s18, 1
    %p149 = por %p147, %p148
    %p151 = scmp.ne.s32.totalorder %s134, %s150
    %p152 = scmp.eq.s32.totalorder %s18, 0
    %p153 = por %p151, %p152
    %s154 = ssub.s32 %s20, %s27
    %p155 = scmp.eq.s32.totalorder %s154, 0
    %s157 = sadd.s32 %s156, 1
    %s158 = scalar_select %p155, %s156, %s157
    %p161 = pneg %p155
    %p162 = scmp.eq.s32.totalorder %s12, 1
    %p163 = por %p161, %p162
    %p164 = scmp.ne.s32.totalorder %s156, %s159
    %p165 = scmp.eq.s32.totalorder %s12, 0
    %p166 = por %p164, %p165
    %p167 = scmp.ne.s32.totalorder %s156, %s159
    %p168 = scmp.eq.s32.totalorder %s17, 1
    %p169 = por %p167, %p168
    %p170 = scmp.ne.s32.totalorder %s159, %s160
    %p171 = scmp.eq.s32.totalorder %s17, 0
    %p172 = por %p170, %p171
    %p173 = scmp.ne.s32.totalorder %s159, %s160
    %p174 = scmp.eq.s32.totalorder %s18, 1
    %p175 = por %p173, %p174
    %p177 = scmp.ne.s32.totalorder %s160, %s176
    %p178 = scmp.eq.s32.totalorder %s18, 0
    %p179 = por %p177, %p178
    %s180 = ssub.s32 %s19, %s31
    %s181 = ssub.s32 %s20, %s27
    %s182 = sor.u32 %s180, %s181
    %p183 = scmp.eq.s32.totalorder %s182, 0
    %s185 = sadd.s32 %s184, 1
    %s186 = scalar_select %p183, %s184, %s185
    %p189 = pneg %p183
    %p190 = scmp.eq.s32.totalorder %s12, 1
    %p191 = por %p189, %p190
    %p192 = scmp.ne.s32.totalorder %s184, %s187
    %p193 = scmp.eq.s32.totalorder %s12, 0
    %p194 = por %p192, %p193
    %p195 = scmp.ne.s32.totalorder %s184, %s187
    %p196 = scmp.eq.s32.totalorder %s17, 1
    %p197 = por %p195, %p196
    %p198 = scmp.ne.s32.totalorder %s187, %s188
    %p199 = scmp.eq.s32.totalorder %s17, 0
    %p200 = por %p198, %p199
    %p201 = scmp.ne.s32.totalorder %s187, %s188
    %p202 = scmp.eq.s32.totalorder %s18, 1
    %p203 = por %p201, %p202
    %p205 = scmp.ne.s32.totalorder %s188, %s204
    %p206 = scmp.eq.s32.totalorder %s18, 0
    %p207 = por %p205, %p206
    %p208 = scmp.le.s32.totalorder 1, %s12
    %p209 = scmp.lt.s32.totalorder %s12, 3
    %p210 = pnand %p208, %p209
    %p211 = pneg %p210
    // Predicated region
    $region9: #{tpu_custom_call.1} parent=5 // pred_check
      _
    $region10: #{tpu_custom_call.1} parent=5 // pred_check_branch
      %213 = sbr.rel (%p210) target = $region12
    $region11: #{tpu_custom_call.1} parent=5 // pred_region
      %s214 = ssub.s32 %s12, 1
      // Predicated region
      $region13: #{tpu_custom_call.1} parent=11 // pred_check
        %p215 = pneg %p73
      $region14: #{tpu_custom_call.1} parent=11 // pred_check_branch
        %217 = sbr.rel (%p215) target = $region16
      $region15: #{tpu_custom_call.1} parent=11 // pred_region
        _
      $region16: #{tpu_custom_call.1} parent=11 // pred_fallthru
        _
      // Predicated region
      $region17: #{tpu_custom_call.1} parent=11 // pred_check
        %p218 = pneg %p94
      $region18: #{tpu_custom_call.1} parent=11 // pred_check_branch
        %220 = sbr.rel (%p218) target = $region20
      $region19: #{tpu_custom_call.1} parent=11 // pred_region
        _
      $region20: #{tpu_custom_call.1} parent=11 // pred_fallthru
        _
      // Predicated region
      $region21: #{tpu_custom_call.1} parent=11 // pred_check
        %p221 = pneg %p120
      $region22: #{tpu_custom_call.1} parent=11 // pred_check_branch
        %223 = sbr.rel (%p221) target = $region24
      $region23: #{tpu_custom_call.1} parent=11 // pred_region
        %p224 = scmp.lt.s32.totalorder %s22, 0
        %s225 = scalar_select %p224, %s22, 0
        %s226 = scalar_lea.vmem %s3, %s225
      $region24: #{tpu_custom_call.1} parent=11 // pred_fallthru
        _
      // Predicated region
      $region25: #{tpu_custom_call.1} parent=11 // pred_check
        %p227 = pneg %p146
      $region26: #{tpu_custom_call.1} parent=11 // pred_check_branch
        %229 = sbr.rel (%p227) target = $region28
      $region27: #{tpu_custom_call.1} parent=11 // pred_region
        %p230 = scmp.lt.s32.totalorder %s22, 0
        %s231 = scalar_select %p230, %s22, 0
        %s232 = scalar_lea.vmem %s4, %s231
      $region28: #{tpu_custom_call.1} parent=11 // pred_fallthru
        _
      // Predicated region
      $region29: #{tpu_custom_call.1} parent=11 // pred_check
        %p233 = pneg %p172
      $region30: #{tpu_custom_call.1} parent=11 // pred_check_branch
        %235 = sbr.rel (%p233) target = $region32
      $region31: #{tpu_custom_call.1} parent=11 // pred_region
        %p236 = scmp.lt.s32.totalorder %s22, 0
        %s237 = scalar_select %p236, %s22, 0
        %s238 = scalar_lea.vmem %s5, %s237
      $region32: #{tpu_custom_call.1} parent=11 // pred_fallthru
        _
    $region12: #{tpu_custom_call.1} parent=5 // pred_fallthru
      _
    %p239 = scmp.lt.s32.totalorder %s12, 2
    // Predicated region
    $region33: #{tpu_custom_call.1} parent=5 // pred_check
      %p240 = pneg %p239
    $region34: #{tpu_custom_call.1} parent=5 // pred_check_branch
      %242 = sbr.rel (%p240) target = $region36
    $region35: #{tpu_custom_call.1} parent=5 // pred_region
      // Predicated region
      $region37: #{tpu_custom_call.1} parent=35 // pred_check
        %p243 = pneg %p46
      $region38: #{tpu_custom_call.1} parent=35 // pred_check_branch
        %245 = sbr.rel (%p243) target = $region40
      $region39: #{tpu_custom_call.1} parent=35 // pred_region
        %p246 = scmp.lt.s32.totalorder %s19, 1
        %s247 = scalar_select %p246, %s19, 1
        %p248 = scmp.lt.s32.totalorder %s20, 0
        %s249 = scalar_select %p248, %s20, 0
        %s250 = smul.addr %s247, 2
        %s251 = sadd.s32 %s249, %s250
        %s252 = smul.addr %s251, 8
        %s253 = scalar_lea.vmem %s0, %s252
      $region40: #{tpu_custom_call.1} parent=35 // pred_fallthru
        _
    $region36: #{tpu_custom_call.1} parent=5 // pred_fallthru
      _
    %p254 = scmp.le.s32.totalorder 1, %s12
    %p255 = scmp.lt.s32.totalorder %s12, 3
    %p256 = pnand %p254, %p255
    %p257 = pneg %p256
    // Predicated region
    $region41: #{tpu_custom_call.1} parent=5 // pred_check
      _
    $region42: #{tpu_custom_call.1} parent=5 // pred_check_branch
      %259 = sbr.rel (%p256) target = $region44
    $region43: #{tpu_custom_call.1} parent=5 // pred_region
      %s260 = ssub.s32 %s12, 1
      %p261 = scmp.lt.s32.totalorder %s21, 1
      %s262 = scalar_select %p261, %s21, 1
      %p263 = scmp.lt.s32.totalorder %s22, 0
      %s264 = scalar_select %p263, %s22, 0
      %s265 = smul.addr %s262, 2
      %s266 = sadd.s32 %s264, %s265
      %s267 = smul.addr %s266, 8
      %s268 = scalar_lea.vmem %s0, %s267
      %p269 = pneg %p52
      %p270 = pneg %p49
      %p271 = pneg %p73
      %p272 = pneg %p70
      %p273 = pneg %p94
      %p274 = pneg %p91
      %p275 = scmp.lt.s32.totalorder %s22, 0
      %s276 = scalar_select %p275, %s22, 0
      %s277 = scalar_lea.vmem %s3, %s276
      %p278 = pneg %p120
      %p279 = pneg %p117
      %p280 = scmp.lt.s32.totalorder %s22, 0
      %s281 = scalar_select %p280, %s22, 0
      %s282 = scalar_lea.vmem %s4, %s281
      %p283 = pneg %p146
      %p284 = pneg %p143
      %p285 = scmp.lt.s32.totalorder %s22, 0
      %s286 = scalar_select %p285, %s22, 0
      %s287 = scalar_lea.vmem %s5, %s286
      %p288 = pneg %p172
      %p289 = pneg %p169
      %p290 = pneg %p200
      %p291 = pneg %p197
      %p292 = scmp.lt.s32.totalorder %s21, 1
      %s293 = scalar_select %p292, %s21, 1
      %p294 = scmp.lt.s32.totalorder %s22, 0
      %s295 = scalar_select %p294, %s22, 0
      %s296 = sadd.s32 %s295, %s293
      %s297 = smul.addr %s296, 8
      %s298 = scalar_lea.vmem %s6, %s297
      %p299 = scmp.lt.s32.totalorder %s21, 1
      %s300 = scalar_select %p299, %s21, 1
      %p301 = scmp.lt.s32.totalorder %s22, 0
      %s302 = scalar_select %p301, %s22, 0
      %s303 = smul.addr %s300, 2
      %s304 = sadd.s32 %s302, %s303
      %s305 = smul.addr %s304, 8
      %s306 = scalar_lea.vmem %s0, %s305
      %p307 = scmp.lt.s32.totalorder %s22, 0
      %s308 = scalar_select %p307, %s22, 0
      %s309 = scalar_lea.vmem %s3, %s308
      %p310 = scmp.lt.s32.totalorder %s22, 0
      %s311 = scalar_select %p310, %s22, 0
      %s312 = scalar_lea.vmem %s4, %s311
      %p313 = scmp.lt.s32.totalorder %s22, 0
      %s314 = scalar_select %p313, %s22, 0
      %s315 = scalar_lea.vmem %s5, %s314
      %p316 = scmp.lt.s32.totalorder %s21, 1
      %s317 = scalar_select %p316, %s21, 1
      %p318 = scmp.lt.s32.totalorder %s22, 0
      %s319 = scalar_select %p318, %s22, 0
      %s320 = sadd.s32 %s319, %s317
      %s321 = smul.addr %s320, 8
      %s322 = scalar_lea.vmem %s6, %s321
      %v324 = vld [vmem:[%s1] sm:$0xf]
      %v325 = vld [vmem:[%s2] sm:$0xff]
      %v326 = vld [vmem:[%s309] sm:$0x1]
      %v327 = vld [vmem:[%s312] sm:$0x1]
      %v328 = vld [vmem:[%s315] sm:$0x1]
      %v329 = vld [vmem:[%s306] sm:$0xff]
      %v330 = vld [vmem:[%s306 + $0x8] sm:$0xff]
      %vm331 = vcmask 31744
      %v332 = vsel %vm331, %v329, 0.0
      %v333 = vsel %vm331, %v330, 0.0
      %v334 = vadd.f32 %v332, %v333
      %v335 = vrot.slane %v334, 4
      %v336 = vadd.f32 %v334, %v335
      %v337 = vrot.slane %v336, 2
      %v338 = vadd.f32 %v336, %v337
      %v339 = vrot.slane %v338, 1
      %v340 = vadd.f32 %v338, %v339
      %v341 = vmul.f32 %v340, 0.0625
      %v342 = vmul.f32 %v329, %v329
      %v343 = vmul.f32 %v330, %v330
      %v344 = vsel %vm331, %v342, 0.0
      %v345 = vsel %vm331, %v343, 0.0
      %v346 = vadd.f32 %v344, %v345
      %v347 = vrot.slane %v346, 4
      %v348 = vadd.f32 %v346, %v347
      %v349 = vrot.slane %v348, 2
      %v350 = vadd.f32 %v348, %v349
      %v351 = vrot.slane %v350, 1
      %v352 = vadd.f32 %v350, %v351
      %v353 = vmul.f32 %v352, 0.0625
      %v354 = vmul.f32 %v341, %v341
      %v355 = vsub.f32 %v353, %v354
      %v356 = vmax.f32 %v355, 0.0
      %v357 = vadd.f32 %v356, 1e-05
      %v358 = vrsqrt.pop %v357
      %v359 = vmul.f32 %v357, %v358
      %v360 = vsub.f32 %v329, %v341
      %v361 = vsub.f32 %v330, %v341
      %v362 = vmul.f32 %v358, %v326
      %v363 = vlaneseq
      %v364 = vshrl.u32 %v363, 7
      %v365 = vsub.s32 0, %v364
      %v366 = vrot.slane %v362, %v365
      %v367 = vmul.f32 %v360, %v366
      %v368 = vmul.f32 %v361, %v366
      %v370 = vlaneseq
      %v371 = vshrl.u32 %v370, 7
      %v372 = vsub.s32 0, %v371
      %v373 = vrot.slane %v327, %v372
      %v375 = vadd.f32 %v367, %v373
      %v376 = vadd.f32 %v368, %v373
      %v377 = vpack.c.bf16 %v376, %v375
      %379 = vset.pattern.permute.xlu0 0
      %380 = vperm.xlu0 %379, %v325
      %v381 = vpop.permute.xlu0 %380
      %vm383 = vcmask 130048
      %v385 = vsel %vm383, %v324, 0
      %387 = vmatprep.subr.bf16.mxu0 0
      %388 = vmatpush1.bf16.msra.mxu0 %v377
      %389 = vmatprep.subr.bf16.mxu0 0
      %390 = vmatpush1.bf16.msra.mxu0 0
      %391 = vmatprep.subr.bf16.mxu0 0
      %392 = vmatpush1.bf16.msra.mxu0 0
      %393 = vmatprep.subr.bf16.mxu0 0
      %394 = vmatpush1.bf16.msra.mxu0 0
      %395 = vmatprep.subr.bf16.mxu0 0
      %396 = vmatpush1.bf16.msra.mxu0 0
      %397 = vmatprep.subr.bf16.mxu0 0
      %398 = vmatpush1.bf16.msra.mxu0 0
      %399 = vmatprep.subr.bf16.mxu0 0
      %400 = vmatpush1.bf16.msra.mxu0 0
      %401 = vmatprep.subr.bf16.mxu0 0
      %402 = vmatpush1.bf16.msra.mxu0 0
      %403 = vmatprep.subr.bf16.mxu0 0
      %404 = vmatpush1.bf16.msra.mxu0 0
      %405 = vmatprep.subr.bf16.mxu0 0
      %406 = vmatpush1.bf16.msra.mxu0 0
      %407 = vmatprep.subr.bf16.mxu0 0
      %408 = vmatpush1.bf16.msra.mxu0 0
      %409 = vmatprep.subr.bf16.mxu0 0
      %410 = vmatpush1.bf16.msra.mxu0 0
      %411 = vmatprep.subr.bf16.mxu0 0
      %412 = vmatpush1.bf16.msra.mxu0 0
      %413 = vmatprep.subr.bf16.mxu0 0
      %414 = vmatpush1.bf16.msra.mxu0 0
      %415 = vmatprep.subr.bf16.mxu0 0
      %416 = vmatpush1.bf16.msra.mxu0 0
      %417 = vmatprep.subr.bf16.mxu0 0
      %418 = vmatpush1.bf16.msra.mxu0 0
      %419 = vmatprep.mubr.bf16.mxu0 0
      %420 = vmatmul.mubr.bf16.gmra.mrb[0].mxu0 %v385
      %v421 = vpop.f32.mrb[0].mxu0
      %v422 = vadd.f32 %v381, %v421
      %v423 = vpop.f32.mrb[0].mxu0
      %v424 = vpop.f32.mrb[0].mxu0
      %v425 = vpop.f32.mrb[0].mxu0
      %426 = vdwg.mxu0
      %v427 = vsub.f32 %v422, %v373
      %v428 = vmul.f32 %v328, %v359
      %v430 = vlaneseq
      %v431 = vshrl.u32 %v430, 7
      %v432 = vsub.s32 0, %v431
      %v433 = vrot.slane %v428, %v432
      %v435 = vmul.f32 %v427, %v433
      %v436 = vadd.f32 %v435, %v341
      %437 = vst.msk [vmem:[%s322] sm:$0xff] %vm331, %v436
      %p438 = scmp.lt.s32.totalorder %s21, 1
      %s439 = scalar_select %p438, %s21, 1
      %p440 = scmp.lt.s32.totalorder %s22, 0
      %s441 = scalar_select %p440, %s22, 0
      %s442 = sadd.s32 %s441, %s439
      %s443 = smul.addr %s442, 8
      %s444 = scalar_lea.vmem %s6, %s443
      // Predicated region
      $region45: #{tpu_custom_call.1} parent=43 // pred_check
        %p445 = pneg %p197
      $region46: #{tpu_custom_call.1} parent=43 // pred_check_branch
        %447 = sbr.rel (%p445) target = $region48
      $region47: #{tpu_custom_call.1} parent=43 // pred_region
        _
      $region48: #{tpu_custom_call.1} parent=43 // pred_fallthru
        _
    $region44: #{tpu_custom_call.1} parent=5 // pred_fallthru
      _
    %p448 = scmp.le.s32.totalorder 2, %s12
    // Predicated region
    $region49: #{tpu_custom_call.1} parent=5 // pred_check
      %p449 = pneg %p448
    $region50: #{tpu_custom_call.1} parent=5 // pred_check_branch
      %451 = sbr.rel (%p449) target = $region52
    $region51: #{tpu_custom_call.1} parent=5 // pred_region
      %s452 = ssub.s32 %s12, 2
      // Predicated region
      $region53: #{tpu_custom_call.1} parent=51 // pred_check
        %p453 = pneg %p203
      $region54: #{tpu_custom_call.1} parent=51 // pred_check_branch
        %455 = sbr.rel (%p453) target = $region56
      $region55: #{tpu_custom_call.1} parent=51 // pred_region
        %p456 = scmp.lt.s32.totalorder %s23, 1
        %s457 = scalar_select %p456, %s23, 1
        %p458 = scmp.lt.s32.totalorder %s24, 0
        %s459 = scalar_select %p458, %s24, 0
        %s460 = sadd.s32 %s459, %s457
        %s461 = smul.addr %s460, 8
        %s462 = scalar_lea.vmem %s6, %s461
      $region56: #{tpu_custom_call.1} parent=51 // pred_fallthru
        _
    $region52: #{tpu_custom_call.1} parent=5 // pred_fallthru
      _
  $region6: #{tpu_custom_call.1} parent=0 // loop_footer
    %s16 = sadd.s32 1, %s12
  $region7: #{tpu_custom_call.1} parent=0 // loop_footer_branch
    %11 = sbr.rel target = $region3
  $region8: #{tpu_custom_call.1} parent=0 // loop_exit
    _

</llo_original>
